<compile_context>
chip_gen: v5e
topology: v5e:2x2
jax: 0.10.0
libtpu: 0.0.40
codegen_flags: <defaults>
</compile_context>

<pallas_src>
import functools

import jax
import jax.numpy as jnp
import numpy as np
from jax import lax
from jax.experimental import pallas as pl
from jax.experimental.pallas import tpu as pltpu


def _rup(x, m):
    return -(-x // m) * m


# ---------------------------------------------------------------------------
# Pallas kernel: whole GatedConvBlock forward for one lane block (all batch
# elements are already folded onto the lane axis host-side).
# ---------------------------------------------------------------------------
def _gated_conv_block_kernel(
    slab_ref,   # (2, Cin_p, L) bf16 : [0]=v stack, [1]=h stack; zero padded;
                #   row `c_in` of each stack is a constant-ones bias channel.
    w_ref,      # (C2, Wcols)   bf16 : packed [Wv | Wh | Wvh | Wh2 | bh2].
    vout_ref,   # (Cout_p, lane_block) bf16
    hout_ref,   # (Cout_p, lane_block) bf16
    *,
    v_starts, h_starts, res_start, lane_block, c_out_p,
    kv, kh, c2, off_vh, off_h2, off_bh2, restricted, splits,
):
    f32, bf16 = jnp.float32, jnp.bfloat16

    if splits == 1:
        lane0 = 0                                    # fully static slices
    else:
        lane0 = pl.multiple_of(pl.program_id(0) * lane_block, 128)

    def gather(stack, starts):
        # Lane-window slices of the resident padded slab -> fused tap matrix
        # (n_taps*Cin_p, N), built entirely in VMEM (no host im2col).
        parts = [slab_ref[stack, :, pl.ds(lane0 + st, lane_block)]
                 for st in starts]
        return parts[0] if len(parts) == 1 else jnp.concatenate(parts, axis=0)

    t_v = gather(0, v_starts)                        # (Kv, N) bf16
    t_h = gather(1, h_starts)                        # (Kh, N) bf16

    # Static column slices of the single packed weight slab (tiny copies).
    w_v = w_ref[:, 0:kv]                             # (C2, Kv)
    w_h = w_ref[:, kv:kv + kh]                       # (C2, Kh)
    w_vh = w_ref[:, off_vh:off_vh + c2]              # (C2, C2)
    w_h2 = w_ref[:c_out_p, off_h2:off_h2 + c_out_p]  # (Cout_p, Cout_p)
    b_h2 = w_ref[:c_out_p, off_bh2:off_bh2 + 1].astype(f32)   # (Cout_p, 1)

    # --- vertical masked conv: gate+signal fused; bias rides the ones channel
    v_pre = jnp.dot(w_v, t_v, preferred_element_type=f32)     # (C2, N)
    vg, vs = v_pre[:c_out_p], v_pre[c_out_p:]
    vout_ref[...] = (jax.nn.sigmoid(vg) * jax.nn.relu(vs)).astype(vout_ref.dtype)

    # --- horizontal masked conv + vertical_to_horizontal 1x1 (single 2Cx2C GEMM)
    # (bh + bvh folded into the ones-channel column of w_h host-side)
    h_pre = (jnp.dot(w_h, t_h, preferred_element_type=f32)
             + jnp.dot(w_vh, v_pre.astype(bf16), preferred_element_type=f32))
    hg, hs = h_pre[:c_out_p], h_pre[c_out_p:]
    h_act = jax.nn.sigmoid(hg) * jax.nn.relu(hs)               # (Cout_p, N)

    # --- horizontal_conv_2 (1x1) + residual ---------------------------------
    h2 = jnp.dot(w_h2, h_act.astype(bf16), preferred_element_type=f32) + b_h2
    if restricted:
        hout_ref[...] = h2.astype(hout_ref.dtype)
    else:
        # Residual read straight from the resident h slab at spatial offset 0.
        # Note: bf16 skip connection; the ones channel (row c_in) only touches
        # a padded output row that is sliced away host-side.
        res = slab_ref[1, :c_out_p, pl.ds(lane0 + res_start, lane_block)]
        hout_ref[...] = (h2 + res.astype(f32)).astype(hout_ref.dtype)


def _default_lane_splits():
    # v7x has 2 TensorCores/chip -> give each a 128-aligned lane half.
    # v5e/v6e have 1 TC -> a single fused step avoids extra per-step overhead.
    try:
        kind = jax.devices()[0].device_kind.lower()
    except Exception:
        return 1
    return 2 if ("v7" in kind or "7x" in kind) else 1


# ---------------------------------------------------------------------------
# Host-side wrapper: layout/packing transforms + pallas_call.
# ---------------------------------------------------------------------------
def gated_conv_block(v_input, h_input, params, *, kernel_size, stride, padding,
                     restricted=False, lane_splits=None):
    """Forward pass matching GatedConvBlock.forward; NCHW in / NCHW out."""
    k, p = kernel_size, padding
    # Flattened-lane tap trick + residual require 'same'-size convs.
    assert stride == 1 and 2 * p == k - 1, "requires stride=1 and padding=(k-1)/2"
    wv, bv, wh, bh, wvh, bvh, wh2, bh2 = params      # PyTorch layouts, masks folded
    n, c_in, hh, ww = v_input.shape
    c_out = wh2.shape[0]
    assert restricted or c_in == c_out

    f32, bf16 = jnp.float32, jnp.bfloat16
    hpd, wpd = hh + 2 * p, ww + 2 * p
    s = hpd * wpd
    s_pad = _rup(s, 128)                 # per-batch lane segment (lane dense)

    c_in_p = _rup(c_in + 1, 8)           # +1 reserves the constant-ones channel
    c_out_p = _rup(c_out, 8)
    c2 = 2 * c_out_p

    # ---- active (mask-nonzero) taps only ('V'/'VR', 'H'/'HR') ---------------
    rows_v = k // 2 if restricted else k // 2 + 1
    cols_h = k // 2 if restricted else k // 2 + 1
    v_taps = [(dh, dw) for dh in range(rows_v) for dw in range(k)]
    h_taps = [(0, dw) for dw in range(cols_h)]
    v_offs = [(dh - p) * wpd + (dw - p) for dh, dw in v_taps]
    h_offs = [dw - p for _, dw in h_taps]
    all_offs = v_offs + h_offs + [0]
    m_front = max(0, -min(all_offs))
    m_back = max(0, max(all_offs))
    lanes = n * s_pad                    # batch folded onto the lane axis
    L = _rup(m_front + lanes + m_back, 128)

    # ---- activations: pad once, flatten, batch-major lanes, ones channel ----
    def to_slab(x):
        xp = jnp.pad(x, ((0, 0), (0, 0), (p, p), (p, p))).reshape(n, c_in, s)
        xp = jnp.pad(xp, ((0, 0), (0, 0), (0, s_pad - s)))            # (n,Cin,s_pad)
        xp = jnp.transpose(xp, (1, 0, 2)).reshape(c_in, lanes)
        slab = jnp.zeros((c_in_p, L), f32)
        slab = slab.at[:c_in, m_front:m_front + lanes].set(xp)
        slab = slab.at[c_in, :].set(1.0)                              # bias channel
        return slab

    slab = jnp.stack([to_slab(v_input), to_slab(h_input)]).astype(bf16)

    # ---- weights: fuse taps, fold biases, pad halves to Cout_p, pack --------
    def fuse_conv(w_oihw, taps, bias):
        o = w_oihw.shape[0]                            # = 2 * c_out
        cols = []
        for t, (dh, dw) in enumerate(taps):
            blk = jnp.zeros((o, c_in_p), f32).at[:, :c_in].set(w_oihw[:, :, dh, dw])
            if t == 0:
                blk = blk.at[:, c_in].set(bias)        # bias rides ones channel once
            cols.append(blk)
        w = jnp.concatenate(cols, axis=1)              # (2*c_out, n_taps*c_in_p)
        out = jnp.zeros((c2, w.shape[1]), f32)         # pad gate/signal halves
        out = out.at[:c_out].set(w[:c_out])
        out = out.at[c_out_p:c_out_p + c_out].set(w[c_out:])
        return out

    wv_f = fuse_conv(wv, v_taps, bv)                   # (C2, Kv)
    wh_f = fuse_conv(wh, h_taps, bh + bvh)             # (C2, Kh), bvh folded
    kv, kh = wv_f.shape[1], wh_f.shape[1]

    wvh_p = jnp.zeros((c2, c2), f32)
    wvh_p = wvh_p.at[:c_out, :c_out].set(wvh[:c_out, :c_out])
    wvh_p = wvh_p.at[:c_out, c_out_p:c_out_p + c_out].set(wvh[:c_out, c_out:])
    wvh_p = wvh_p.at[c_out_p:c_out_p + c_out, :c_out].set(wvh[c_out:, :c_out])
    wvh_p = wvh_p.at[c_out_p:c_out_p + c_out,
                     c_out_p:c_out_p + c_out].set(wvh[c_out:, c_out:])
    wh2_p = jnp.zeros((c2, c_out_p), f32).at[:c_out, :c_out].set(wh2)
    bh2_p = jnp.zeros((c2, 1), f32).at[:c_out, 0].set(bh2)

    off_vh = kv + kh
    off_h2 = off_vh + c2
    off_bh2 = off_h2 + c_out_p
    w_cols = _rup(off_bh2 + 1, 128)
    w_slab = jnp.zeros((c2, w_cols), f32)
    w_slab = w_slab.at[:, :kv].set(wv_f)
    w_slab = w_slab.at[:, kv:off_vh].set(wh_f)
    w_slab = w_slab.at[:, off_vh:off_h2].set(wvh_p)
    w_slab = w_slab.at[:, off_h2:off_bh2].set(wh2_p)
    w_slab = w_slab.at[:, off_bh2:off_bh2 + 1].set(bh2_p)
    w_slab = w_slab.astype(bf16)

    # ---- grid: lane-split only where there are multiple TensorCores ---------
    splits = lane_splits if lane_splits is not None else _default_lane_splits()
    if splits < 1 or lanes % (max(splits, 1) * 128) != 0:
        splits = 1
    lane_block = lanes // splits

    kern = functools.partial(
        _gated_conv_block_kernel,
        v_starts=tuple(m_front + o for o in v_offs),
        h_starts=tuple(m_front + o for o in h_offs),
        res_start=m_front, lane_block=lane_block, c_out_p=c_out_p,
        kv=kv, kh=kh, c2=c2, off_vh=off_vh, off_h2=off_h2, off_bh2=off_bh2,
        restricted=restricted, splits=splits)

    flops = 2 * lanes * (c2 * kv + c2 * kh + c2 * c2 + c_out_p * c_out_p)
    transcendentals = 2 * c_out_p * lanes
    bytes_accessed = int(slab.size * 2 + w_slab.size * 2
                         + 2 * c_out_p * lanes * 2)

    vout_flat, hout_flat = pl.pallas_call(
        kern,
        out_shape=(jax.ShapeDtypeStruct((c_out_p, lanes), bf16),
                   jax.ShapeDtypeStruct((c_out_p, lanes), bf16)),
        grid=(splits,),
        in_specs=[
            # Full slab + full weight pack: constant index maps => fetched once.
            pl.BlockSpec((2, c_in_p, L), lambda i: (0, 0, 0)),
            pl.BlockSpec((c2, w_cols), lambda i: (0, 0)),
        ],
        out_specs=(pl.BlockSpec((c_out_p, lane_block), lambda i: (0, i)),
                   pl.BlockSpec((c_out_p, lane_block), lambda i: (0, i))),
        compiler_params=pltpu.CompilerParams(
            dimension_semantics=("parallel",)),
        cost_estimate=pl.CostEstimate(flops=flops,
                                      transcendentals=transcendentals,
                                      bytes_accessed=bytes_accessed),
    )(slab, w_slab)

    # (Cout_p, n*s_pad) -> drop channel/lane padding, un-pad spatial -> NCHW.
    def unpack(o):
        o = o.reshape(c_out_p, n, s_pad).transpose(1, 0, 2)[:, :c_out, :s]
        o = o.reshape(n, c_out, hpd, wpd)[:, :, p:p + hh, p:p + ww]
        return o.astype(v_input.dtype)

    return unpack(vout_flat), unpack(hout_flat)


# ---------------------------------------------------------------------------
# Deterministic synthetic parameter init (PyTorch layouts, masks folded in).
# ---------------------------------------------------------------------------
def init_params(key, in_channels, out_channels, kernel_size, restricted):
    k = kernel_size
    two_c = 2 * out_channels
    keys = jax.random.split(key, 8)
    sc = 0.1

    wv = sc * jax.random.normal(keys[0], (two_c, in_channels, k, k), jnp.float32)
    rows = k // 2 if restricted else k // 2 + 1        # 'VR' vs 'V' mask
    mask_v = jnp.zeros((1, 1, k, k), jnp.float32).at[:, :, :rows, :].set(1.0)
    wv = wv * mask_v
    bv = sc * jax.random.normal(keys[1], (two_c,), jnp.float32)

    wh = sc * jax.random.normal(keys[2], (two_c, in_channels, 1, k), jnp.float32)
    cols = k // 2 if restricted else k // 2 + 1        # 'HR' vs 'H' mask
    mask_h = jnp.zeros((1, 1, 1, k), jnp.float32).at[:, :, 0, :cols].set(1.0)
    wh = wh * mask_h
    bh = sc * jax.random.normal(keys[3], (two_c,), jnp.float32)

    wvh = sc * jax.random.normal(keys[4], (two_c, two_c), jnp.float32)   # (out, in)
    bvh = sc * jax.random.normal(keys[5], (two_c,), jnp.float32)
    wh2 = sc * jax.random.normal(keys[6], (out_channels, out_channels), jnp.float32)
    bh2 = sc * jax.random.normal(keys[7], (out_channels,), jnp.float32)

    return (wv, bv, wh, bh, wvh, bvh, wh2, bh2)


# ---------------------------------------------------------------------------
# Pure-JAX NCHW reference (mirrors the PyTorch forward) for verification.
# ---------------------------------------------------------------------------
def reference_forward(v_in, h_in, params, *, padding, restricted):
    wv, bv, wh, bh, wvh, bvh, wh2, bh2 = params
    p = padding
    dn = ("NCHW", "OIHW", "NCHW")

    def gated(x):
        c = x.shape[1]
        return jax.nn.relu(x[:, c // 2:]) * jax.nn.sigmoid(x[:, :c // 2])

    v_conv = lax.conv_general_dilated(
        v_in, wv, (1, 1), [(p, p), (p, p)],
        dimension_numbers=dn) + bv.reshape(1, -1, 1, 1)
    v_out = gated(v_conv)

    v_to_h = jnp.einsum("oi,nihw->nohw", wvh, v_conv) + bvh.reshape(1, -1, 1, 1)

    h_conv = lax.conv_general_dilated(
        h_in, wh, (1, 1), [(0, 0), (p, p)],
        dimension_numbers=dn) + bh.reshape(1, -1, 1, 1)
    h_act = gated(h_conv + v_to_h)
    h2 = jnp.einsum("oi,nihw->nohw", wh2, h_act) + bh2.reshape(1, -1, 1, 1)
    h_out = h2 if restricted else h2 + h_in
    return v_out, h_out


# ---------------------------------------------------------------------------
if __name__ == "__main__":
    batch, channels, height, width = 2, 4, 16, 16
    kernel_size, stride, padding, restricted = 3, 1, 1, False

    key = jax.random.PRNGKey(0)
    k_params, k_v, k_h = jax.random.split(key, 3)

    params = init_params(k_params, channels, channels, kernel_size, restricted)
    v_input = jax.random.normal(k_v, (batch, channels, height, width), jnp.float32)
    h_input = jax.random.normal(k_h, (batch, channels, height, width), jnp.float32)

    v_out, h_out = gated_conv_block(v_input, h_input, params,
                                    kernel_size=kernel_size, stride=stride,
                                    padding=padding, restricted=restricted)
    jax.block_until_ready((v_out, h_out))

    # Reference computed in f32 from bf16-rounded inputs/weights (the kernel's
    # MXU operands, folded biases and outputs are bf16); tolerance covers the
    # remaining in-kernel casts.
    def _q(x):
        return x.astype(jnp.bfloat16).astype(jnp.float32)

    params_q = tuple(_q(pp) if pp.ndim >= 2 else pp for pp in params)
    v_expected, h_expected = reference_forward(_q(v_input), _q(h_input), params_q,
                                               padding=padding,
                                               restricted=restricted)

    assert v_out.shape == (batch, channels, height, width)
    assert h_out.shape == (batch, channels, height, width)
    np.testing.assert_allclose(np.asarray(v_out), np.asarray(v_expected),
                               rtol=3e-2, atol=3e-2)
    np.testing.assert_allclose(np.asarray(h_out), np.asarray(h_expected),
                               rtol=3e-2, atol=3e-2)
    print("KERNEL_OK")
</pallas_src>

<mosaic_0001>
module attributes {stable_mosaic.version = 11 : i64} {
  func.func @_gated_conv_block_kernel(%arg0: i32, %arg1: memref<2x8x896xbf16, #tpu.memory_space<vmem>>, %arg2: memref<16x128xbf16, #tpu.memory_space<vmem>>, %arg3: memref<8x768xbf16, #tpu.memory_space<vmem>>, %arg4: memref<8x768xbf16, #tpu.memory_space<vmem>>) attributes {dimension_semantics = [#tpu.dimension_semantics<parallel>], iteration_bounds = array<i64: 1>, scalar_prefetch = 0 : i64, scratch_operands = 0 : i64, tpu.core_type = #tpu.core_type<tc>, window_params = [{pipeline_mode = #tpu.pipeline_mode<synchronous>, transform_indices = @transform_0, window_bounds = array<i64: 2, 8, 896>}, {pipeline_mode = #tpu.pipeline_mode<synchronous>, transform_indices = @transform_1, window_bounds = array<i64: 16, 128>}, {transform_indices = @transform_2, window_bounds = array<i64: 8, 768>}, {transform_indices = @transform_3, window_bounds = array<i64: 8, 768>}]} {
    %c0 = arith.constant 0 : index
    %c0_0 = arith.constant 0 : index
    %c0_1 = arith.constant 0 : index
    %0 = vector.load %arg1[%c0, %c0_0, %c0_1] : memref<2x8x896xbf16, #tpu.memory_space<vmem>>, vector<1x8x768xbf16>
    %1 = vector.shape_cast %0 : vector<1x8x768xbf16> to vector<8x768xbf16>
    %c0_2 = arith.constant 0 : index
    %c0_3 = arith.constant 0 : index
    %c1 = arith.constant 1 : index
    %2 = vector.load %arg1[%c0_2, %c0_3, %c1] : memref<2x8x896xbf16, #tpu.memory_space<vmem>>, vector<1x8x768xbf16>
    %3 = vector.shape_cast %2 : vector<1x8x768xbf16> to vector<8x768xbf16>
    %c0_4 = arith.constant 0 : index
    %c0_5 = arith.constant 0 : index
    %c2 = arith.constant 2 : index
    %4 = vector.load %arg1[%c0_4, %c0_5, %c2] : memref<2x8x896xbf16, #tpu.memory_space<vmem>>, vector<1x8x768xbf16>
    %5 = vector.shape_cast %4 : vector<1x8x768xbf16> to vector<8x768xbf16>
    %c0_6 = arith.constant 0 : index
    %c0_7 = arith.constant 0 : index
    %c18 = arith.constant 18 : index
    %6 = vector.load %arg1[%c0_6, %c0_7, %c18] : memref<2x8x896xbf16, #tpu.memory_space<vmem>>, vector<1x8x768xbf16>
    %7 = vector.shape_cast %6 : vector<1x8x768xbf16> to vector<8x768xbf16>
    %c0_8 = arith.constant 0 : index
    %c0_9 = arith.constant 0 : index
    %c19 = arith.constant 19 : index
    %8 = vector.load %arg1[%c0_8, %c0_9, %c19] : memref<2x8x896xbf16, #tpu.memory_space<vmem>>, vector<1x8x768xbf16>
    %9 = vector.shape_cast %8 : vector<1x8x768xbf16> to vector<8x768xbf16>
    %c0_10 = arith.constant 0 : index
    %c0_11 = arith.constant 0 : index
    %c20 = arith.constant 20 : index
    %10 = vector.load %arg1[%c0_10, %c0_11, %c20] : memref<2x8x896xbf16, #tpu.memory_space<vmem>>, vector<1x8x768xbf16>
    %11 = vector.shape_cast %10 : vector<1x8x768xbf16> to vector<8x768xbf16>
    %12 = tpu.concatenate %1, %3, %5, %7, %9, %11 in 0 : vector<8x768xbf16>, vector<8x768xbf16>, vector<8x768xbf16>, vector<8x768xbf16>, vector<8x768xbf16>, vector<8x768xbf16> -> vector<48x768xbf16>
    %c1_12 = arith.constant 1 : index
    %c0_13 = arith.constant 0 : index
    %c18_14 = arith.constant 18 : index
    %13 = vector.load %arg1[%c1_12, %c0_13, %c18_14] : memref<2x8x896xbf16, #tpu.memory_space<vmem>>, vector<1x8x768xbf16>
    %14 = vector.shape_cast %13 : vector<1x8x768xbf16> to vector<8x768xbf16>
    %c1_15 = arith.constant 1 : index
    %c0_16 = arith.constant 0 : index
    %c19_17 = arith.constant 19 : index
    %15 = vector.load %arg1[%c1_15, %c0_16, %c19_17] : memref<2x8x896xbf16, #tpu.memory_space<vmem>>, vector<1x8x768xbf16>
    %16 = vector.shape_cast %15 : vector<1x8x768xbf16> to vector<8x768xbf16>
    %17 = tpu.concatenate %14, %16 in 0 : vector<8x768xbf16>, vector<8x768xbf16> -> vector<16x768xbf16>
    %c0_18 = arith.constant 0 : index
    %c0_19 = arith.constant 0 : index
    %18 = vector.load %arg2[%c0_18, %c0_19] : memref<16x128xbf16, #tpu.memory_space<vmem>>, vector<16x48xbf16>
    %c0_20 = arith.constant 0 : index
    %c48 = arith.constant 48 : index
    %19 = vector.load %arg2[%c0_20, %c48] : memref<16x128xbf16, #tpu.memory_space<vmem>>, vector<16x16xbf16>
    %c0_21 = arith.constant 0 : index
    %c64 = arith.constant 64 : index
    %20 = vector.load %arg2[%c0_21, %c64] : memref<16x128xbf16, #tpu.memory_space<vmem>>, vector<16x16xbf16>
    %c0_22 = arith.constant 0 : index
    %c80 = arith.constant 80 : index
    %21 = vector.load %arg2[%c0_22, %c80] : memref<16x128xbf16, #tpu.memory_space<vmem>>, vector<8x8xbf16>
    %c0_23 = arith.constant 0 : index
    %c88 = arith.constant 88 : index
    %22 = vector.load %arg2[%c0_23, %c88] : memref<16x128xbf16, #tpu.memory_space<vmem>>, vector<8x1xbf16>
    %23 = arith.extf %22 : vector<8x1xbf16> to vector<8x1xf32>
    %cst = arith.constant dense<0.000000e+00> : vector<16x768xf32>
    %24 = tpu.matmul %18, %12, %cst {dimension_numbers = #tpu.dot_dimension_numbers<[1], [0], [0], [1], [0, 0, 1, 1], [], []>} : vector<16x48xbf16>, vector<48x768xbf16>, vector<16x768xf32> -> vector<16x768xf32>
    %25 = vector.extract_strided_slice %24 {offsets = [0, 0], sizes = [8, 768], strides = [1, 1]} : vector<16x768xf32> to vector<8x768xf32>
    %26 = vector.extract_strided_slice %24 {offsets = [8, 0], sizes = [8, 768], strides = [1, 1]} : vector<16x768xf32> to vector<8x768xf32>
    %27 = arith.negf %25 : vector<8x768xf32>
    %28 = math.exp %27 : vector<8x768xf32>
    %cst_24 = arith.constant 1.000000e+00 : f32
    %29 = vector.broadcast %cst_24 : f32 to vector<8x768xf32>
    %30 = arith.addf %29, %28 : vector<8x768xf32>
    %31 = arith.divf %29, %30 : vector<8x768xf32>
    %cst_25 = arith.constant 0.000000e+00 : f32
    %32 = vector.broadcast %cst_25 : f32 to vector<8x768xf32>
    %33 = arith.maximumf %26, %32 : vector<8x768xf32>
    %34 = arith.mulf %31, %33 : vector<8x768xf32>
    %35 = arith.truncf %34 : vector<8x768xf32> to vector<8x768xbf16>
    %c0_26 = arith.constant 0 : index
    %c0_27 = arith.constant 0 : index
    %36 = vector.load %arg3[%c0_26, %c0_27] : memref<8x768xbf16, #tpu.memory_space<vmem>>, vector<8x768xbf16>
    tpu.vector_store %arg3[%c0_26, %c0_27], %35 {strides = array<i32>} : memref<8x768xbf16, #tpu.memory_space<vmem>>, vector<8x768xbf16>,
    %cst_28 = arith.constant dense<0.000000e+00> : vector<16x768xf32>
    %37 = tpu.matmul %19, %17, %cst_28 {dimension_numbers = #tpu.dot_dimension_numbers<[1], [0], [0], [1], [0, 0, 1, 1], [], []>} : vector<16x16xbf16>, vector<16x768xbf16>, vector<16x768xf32> -> vector<16x768xf32>
    %38 = arith.truncf %24 : vector<16x768xf32> to vector<16x768xbf16>
    %cst_29 = arith.constant dense<0.000000e+00> : vector<16x768xf32>
    %39 = tpu.matmul %20, %38, %cst_29 {dimension_numbers = #tpu.dot_dimension_numbers<[1], [0], [0], [1], [0, 0, 1, 1], [], []>} : vector<16x16xbf16>, vector<16x768xbf16>, vector<16x768xf32> -> vector<16x768xf32>
    %40 = arith.addf %37, %39 : vector<16x768xf32>
    %41 = vector.extract_strided_slice %40 {offsets = [0, 0], sizes = [8, 768], strides = [1, 1]} : vector<16x768xf32> to vector<8x768xf32>
    %42 = vector.extract_strided_slice %40 {offsets = [8, 0], sizes = [8, 768], strides = [1, 1]} : vector<16x768xf32> to vector<8x768xf32>
    %43 = arith.negf %41 : vector<8x768xf32>
    %44 = math.exp %43 : vector<8x768xf32>
    %cst_30 = arith.constant 1.000000e+00 : f32
    %45 = vector.broadcast %cst_30 : f32 to vector<8x768xf32>
    %46 = arith.addf %45, %44 : vector<8x768xf32>
    %47 = arith.divf %45, %46 : vector<8x768xf32>
    %cst_31 = arith.constant 0.000000e+00 : f32
    %48 = vector.broadcast %cst_31 : f32 to vector<8x768xf32>
    %49 = arith.maximumf %42, %48 : vector<8x768xf32>
    %50 = arith.mulf %47, %49 : vector<8x768xf32>
    %51 = arith.truncf %50 : vector<8x768xf32> to vector<8x768xbf16>
    %cst_32 = arith.constant dense<0.000000e+00> : vector<8x768xf32>
    %52 = tpu.matmul %21, %51, %cst_32 {dimension_numbers = #tpu.dot_dimension_numbers<[1], [0], [0], [1], [0, 0, 1, 1], [], []>} : vector<8x8xbf16>, vector<8x768xbf16>, vector<8x768xf32> -> vector<8x768xf32>
    %53 = vector.broadcast %23 : vector<8x1xf32> to vector<8x768xf32>
    %54 = arith.addf %52, %53 : vector<8x768xf32>
    %c1_33 = arith.constant 1 : index
    %c0_34 = arith.constant 0 : index
    %c19_35 = arith.constant 19 : index
    %55 = vector.load %arg1[%c1_33, %c0_34, %c19_35] : memref<2x8x896xbf16, #tpu.memory_space<vmem>>, vector<1x8x768xbf16>
    %56 = vector.shape_cast %55 : vector<1x8x768xbf16> to vector<8x768xbf16>
    %57 = arith.extf %56 : vector<8x768xbf16> to vector<8x768xf32>
    %58 = arith.addf %54, %57 : vector<8x768xf32>
    %59 = arith.truncf %58 : vector<8x768xf32> to vector<8x768xbf16>
    %c0_36 = arith.constant 0 : index
    %c0_37 = arith.constant 0 : index
    %60 = vector.load %arg4[%c0_36, %c0_37] : memref<8x768xbf16, #tpu.memory_space<vmem>>, vector<8x768xbf16>
    tpu.vector_store %arg4[%c0_36, %c0_37], %59 {strides = array<i32>} : memref<8x768xbf16, #tpu.memory_space<vmem>>, vector<8x768xbf16>,
    return
  }
  func.func @transform_0(%arg0: i32) -> (i32, i32, i32) {
    %c0_i32 = arith.constant 0 : i32
    %c0_i32_0 = arith.constant 0 : i32
    %c0_i32_1 = arith.constant 0 : i32
    %c0_i32_2 = arith.constant 0 : i32
    return %c0_i32, %c0_i32_0, %c0_i32_1 : i32, i32, i32
  }
  func.func @transform_1(%arg0: i32) -> (i32, i32) {
    %c0_i32 = arith.constant 0 : i32
    %c0_i32_0 = arith.constant 0 : i32
    %c0_i32_1 = arith.constant 0 : i32
    return %c0_i32, %c0_i32_0 : i32, i32
  }
  func.func @transform_2(%arg0: i32) -> (i32, i32) {
    %c0_i32 = arith.constant 0 : i32
    %c0_i32_0 = arith.constant 0 : i32
    return %c0_i32, %arg0 : i32, i32
  }
  func.func @transform_3(%arg0: i32) -> (i32, i32) {
    %c0_i32 = arith.constant 0 : i32
    %c0_i32_0 = arith.constant 0 : i32
    return %c0_i32, %arg0 : i32, i32
  }
}

</mosaic_0001>

<llo_original>
// kernel: tpu_custom_call.1
$region0: #{tpu_custom_call.1}
  #allocation0 [shape = 'u32[]', space=smem, size = 0x4, offset = 0x4, fixed_abs, tag = 'smem constant byte address 0x4 - core index']
  #allocation1 [shape = 'u32[72,128]{1,0:T(1,128)}', space=vmem, size = 0x9000, scoped, tag = 'internal scratch']
  %s0 = inlined_call_operand.hbm [shape: bf16[2,8,896], index: 0, kind: input, shape index: {}]
  %s1 = inlined_call_operand.hbm [shape: bf16[16,128], index: 1, kind: input, shape index: {}]
  %s2 = inlined_call_operand.hbm [shape: bf16[8,768], index: 2, kind: output, shape index: {0}]
  %s3 = inlined_call_operand.hbm [shape: bf16[8,768], index: 3, kind: output, shape index: {1}]
  %4 = xla_tuple %s2, %s3
  %s5 = sld [smem:[#allocation0]]
  $region34: #{tpu_custom_call.1} parent=0
    _
  %s7 = ssub.s32 1, %s5
  %s8 = scalar_select 0, %s7, %s5
  $region1: #{tpu_custom_call.1} parent=0
    #allocation2 [shape = 'u8[28672]{0}', space=vmem, size = 0x7000, scoped, tag = 'input window, operand 0, single buffered']
    #allocation3 [shape = 's32[1]{0}', space=sflag, size = 0x4, scoped, tag = 'scoped memory for tpu_custom_call.1']
    #allocation4 [shape = 's32[1]{0}', space=sflag, size = 0x4, scoped, tag = 'scoped memory for tpu_custom_call.1']
    #allocation5 [shape = 'u8[4096]{0}', space=vmem, size = 0x1000, scoped, tag = 'input window, operand 1, single buffered']
    #allocation6 [shape = 's32[1]{0}', space=sflag, size = 0x4, scoped, tag = 'scoped memory for tpu_custom_call.1']
    #allocation7 [shape = 'u8[12288]{0}', space=vmem, size = 0x3000, scoped, tag = 'output window, operand 0, single buffered']
    #allocation8 [shape = 'u8[12288]{0}', space=vmem, size = 0x3000, scoped, tag = 'output window, operand 1, single buffered']
    #allocation9 [shape = 's32[1]{0}', space=sflag, size = 0x4, scoped, tag = 'scoped memory for tpu_custom_call.1']
    %9 = vsyncpa [#allocation3], 0
    %10 = vsyncpa [#allocation6], 0
    %11 = vsyncpa [#allocation4], 0
    %12 = vsyncpa [#allocation9], 0
    // Predicated region
    $region2: #{tpu_custom_call.1} parent=1 // pred_check
      _
    $region3: #{tpu_custom_call.1} parent=1 // pred_check_branch
      %14 = sbr.rel (0) target = $region5
    $region4: #{tpu_custom_call.1} parent=1 // pred_region
      %16 = vsyncadd [#allocation3], 0
      %s17 = sshll.u32 %s0, 4
      %s18 = int_to_ptr.hbm [resolvable:$true] %s17
      %s19 = sshll.u32 [#allocation2], 4
      %s20 = int_to_ptr.vmem [resolvable:$true] %s19
      %25 = dma.hbm_to_vmem [thread:$0]  %s18, 896, %s20, [#allocation3], 448, 448, 28
    $region5: #{tpu_custom_call.1} parent=1 // pred_fallthru
      _
    // Predicated region
    $region6: #{tpu_custom_call.1} parent=1 // pred_check
      _
    $region7: #{tpu_custom_call.1} parent=1 // pred_check_branch
      %27 = sbr.rel (0) target = $region9
    $region8: #{tpu_custom_call.1} parent=1 // pred_region
      %29 = vsyncadd [#allocation6], 0
      %s30 = sshll.u32 %s1, 4
      %s31 = int_to_ptr.hbm [resolvable:$true] %s30
      %s32 = sshll.u32 [#allocation5], 4
      %s33 = int_to_ptr.vmem [resolvable:$true] %s32
      %38 = dma.hbm_to_vmem [thread:$0]  %s31, 128, %s33, [#allocation6], 64, 64, 4
    $region9: #{tpu_custom_call.1} parent=1 // pred_fallthru
      _
    // Predicated region
    $region10: #{tpu_custom_call.1} parent=1 // pred_check
      _
    $region11: #{tpu_custom_call.1} parent=1 // pred_check_branch
      %40 = sbr.rel (0) target = $region13
    $region12: #{tpu_custom_call.1} parent=1 // pred_region
      %42 = dma.done [#allocation3], 896
    $region13: #{tpu_custom_call.1} parent=1 // pred_fallthru
      _
    // Predicated region
    $region14: #{tpu_custom_call.1} parent=1 // pred_check
      _
    $region15: #{tpu_custom_call.1} parent=1 // pred_check_branch
      %44 = sbr.rel (0) target = $region17
    $region16: #{tpu_custom_call.1} parent=1 // pred_region
      %46 = dma.done [#allocation6], 128
    $region17: #{tpu_custom_call.1} parent=1 // pred_fallthru
      _
    %v48 = vld [vmem:[#allocation2] sm:$0xff]
    %v49 = vld [vmem:[#allocation2 + $0x8] sm:$0xff]
    %v50 = vld [vmem:[#allocation2 + $0x10] sm:$0xff]
    %v51 = vld [vmem:[#allocation2 + $0x18] sm:$0xf]
    %v55 = vunpack.c.l.b16 %v48
    %v56 = vunpack.c.h.b16 %v48
    %v57 = vunpack.c.l.b16 %v49
    %v58 = vunpack.c.h.b16 %v49
    %v59 = vunpack.c.l.b16 %v50
    %v60 = vunpack.c.h.b16 %v50
    %v61 = vpack.c.b16 %v55, %v55
    %v62 = vpack.c.b16 %v56, %v56
    %v63 = vpack.c.b16 %v57, %v57
    %v64 = vpack.c.b16 %v58, %v58
    %v65 = vpack.c.b16 %v59, %v59
    %v66 = vpack.c.b16 %v60, %v60
    %v68 = vunpack.c.l.b16 %v51
    %v69 = vpack.c.b16 %v68, %v68
    %70 = vrot.lane.b32.xlu0 %v61, 127
    %v71 = vpop.permute.xlu0 %70
    %72 = vrot.lane.b32.xlu0 %v62, 127
    %v73 = vpop.permute.xlu0 %72
    %74 = vrot.lane.b32.xlu0 %v63, 127
    %v75 = vpop.permute.xlu0 %74
    %76 = vrot.lane.b32.xlu0 %v64, 127
    %v77 = vpop.permute.xlu0 %76
    %78 = vrot.lane.b32.xlu0 %v65, 127
    %v79 = vpop.permute.xlu0 %78
    %80 = vrot.lane.b32.xlu0 %v66, 127
    %v81 = vpop.permute.xlu0 %80
    %82 = vrot.lane.b32.xlu0 %v69, 127
    %v83 = vpop.permute.xlu0 %82
    %vm84 = vcmask 1039360
    %v85 = vsel %vm84, %v71, %v73
    %v86 = vsel %vm84, %v73, %v75
    %v87 = vsel %vm84, %v75, %v77
    %v88 = vsel %vm84, %v77, %v79
    %v89 = vsel %vm84, %v79, %v81
    %v90 = vsel %vm84, %v81, %v83
    %91 = vrot.lane.b32.xlu0 %v61, 126
    %v92 = vpop.permute.xlu0 %91
    %93 = vrot.lane.b32.xlu0 %v62, 126
    %v94 = vpop.permute.xlu0 %93
    %95 = vrot.lane.b32.xlu0 %v63, 126
    %v96 = vpop.permute.xlu0 %95
    %97 = vrot.lane.b32.xlu0 %v64, 126
    %v98 = vpop.permute.xlu0 %97
    %99 = vrot.lane.b32.xlu0 %v65, 126
    %v100 = vpop.permute.xlu0 %99
    %101 = vrot.lane.b32.xlu0 %v66, 126
    %v102 = vpop.permute.xlu0 %101
    %103 = vrot.lane.b32.xlu0 %v69, 126
    %v104 = vpop.permute.xlu0 %103
    %vm105 = vcmask 1031168
    %v106 = vsel %vm105, %v92, %v94
    %v107 = vsel %vm105, %v94, %v96
    %v108 = vsel %vm105, %v96, %v98
    %v109 = vsel %vm105, %v98, %v100
    %v110 = vsel %vm105, %v100, %v102
    %v111 = vsel %vm105, %v102, %v104
    %112 = vrot.lane.b32.xlu0 %v61, 110
    %v113 = vpop.permute.xlu0 %112
    %114 = vrot.lane.b32.xlu0 %v62, 110
    %v115 = vpop.permute.xlu0 %114
    %116 = vrot.lane.b32.xlu0 %v63, 110
    %v117 = vpop.permute.xlu0 %116
    %118 = vrot.lane.b32.xlu0 %v64, 110
    %v119 = vpop.permute.xlu0 %118
    %120 = vrot.lane.b32.xlu0 %v65, 110
    %v121 = vpop.permute.xlu0 %120
    %122 = vrot.lane.b32.xlu0 %v66, 110
    %v123 = vpop.permute.xlu0 %122
    %124 = vrot.lane.b32.xlu0 %v69, 110
    %v125 = vpop.permute.xlu0 %124
    %vm126 = vcmask 900096
    %v127 = vsel %vm126, %v113, %v115
    %v128 = vsel %vm126, %v115, %v117
    %v129 = vsel %vm126, %v117, %v119
    %v130 = vsel %vm126, %v119, %v121
    %v131 = vsel %vm126, %v121, %v123
    %v132 = vsel %vm126, %v123, %v125
    %133 = vrot.lane.b32.xlu0 %v61, 109
    %v134 = vpop.permute.xlu0 %133
    %135 = vrot.lane.b32.xlu0 %v62, 109
    %v136 = vpop.permute.xlu0 %135
    %137 = vrot.lane.b32.xlu0 %v63, 109
    %v138 = vpop.permute.xlu0 %137
    %139 = vrot.lane.b32.xlu0 %v64, 109
    %v140 = vpop.permute.xlu0 %139
    %141 = vrot.lane.b32.xlu0 %v65, 109
    %v142 = vpop.permute.xlu0 %141
    %143 = vrot.lane.b32.xlu0 %v66, 109
    %v144 = vpop.permute.xlu0 %143
    %145 = vrot.lane.b32.xlu0 %v69, 109
    %v146 = vpop.permute.xlu0 %145
    %vm147 = vcmask 891904
    %v148 = vsel %vm147, %v134, %v136
    %v149 = vsel %vm147, %v136, %v138
    %v150 = vsel %vm147, %v138, %v140
    %v151 = vsel %vm147, %v140, %v142
    %v152 = vsel %vm147, %v142, %v144
    %v153 = vsel %vm147, %v144, %v146
    %154 = vrot.lane.b32.xlu0 %v61, 108
    %v155 = vpop.permute.xlu0 %154
    %156 = vrot.lane.b32.xlu0 %v62, 108
    %v157 = vpop.permute.xlu0 %156
    %158 = vrot.lane.b32.xlu0 %v63, 108
    %v159 = vpop.permute.xlu0 %158
    %160 = vrot.lane.b32.xlu0 %v64, 108
    %v161 = vpop.permute.xlu0 %160
    %162 = vrot.lane.b32.xlu0 %v65, 108
    %v163 = vpop.permute.xlu0 %162
    %164 = vrot.lane.b32.xlu0 %v66, 108
    %v165 = vpop.permute.xlu0 %164
    %166 = vrot.lane.b32.xlu0 %v69, 108
    %v167 = vpop.permute.xlu0 %166
    %vm168 = vcmask 883712
    %v169 = vsel %vm168, %v155, %v157
    %v170 = vsel %vm168, %v157, %v159
    %v171 = vsel %vm168, %v159, %v161
    %v172 = vsel %vm168, %v161, %v163
    %v173 = vsel %vm168, %v163, %v165
    %v174 = vsel %vm168, %v165, %v167
    %vm175 = vcmask 1043456
    %v178 = vsel %vm175, %v61, %v85
    %v182 = vsel %vm175, %v62, %v86
    %v186 = vsel %vm175, %v63, %v87
    %v190 = vsel %vm175, %v64, %v88
    %v194 = vsel %vm175, %v65, %v89
    %v198 = vsel %vm175, %v66, %v90
    %v202 = vsel %vm175, %v106, %v127
    %v206 = vsel %vm175, %v107, %v128
    %v210 = vsel %vm175, %v108, %v129
    %v214 = vsel %vm175, %v109, %v130
    %v218 = vsel %vm175, %v110, %v131
    %v222 = vsel %vm175, %v111, %v132
    %v226 = vsel %vm175, %v148, %v169
    %v230 = vsel %vm175, %v149, %v170
    %v234 = vsel %vm175, %v150, %v171
    %v238 = vsel %vm175, %v151, %v172
    %v242 = vsel %vm175, %v152, %v173
    %v246 = vsel %vm175, %v153, %v174
    %s248 = scalar_lea.vmem [#allocation2], 28
    %v249 = vld [vmem:[%s248] sm:$0xff]
    %v250 = vld [vmem:[%s248 + $0x8] sm:$0xff]
    %v251 = vld [vmem:[%s248 + $0x10] sm:$0xff]
    %v252 = vld [vmem:[%s248 + $0x18] sm:$0xf]
    %v257 = vunpack.c.l.b16 %v249
    %v258 = vunpack.c.h.b16 %v249
    %v259 = vunpack.c.l.b16 %v250
    %v260 = vunpack.c.h.b16 %v250
    %v261 = vunpack.c.l.b16 %v251
    %v262 = vunpack.c.h.b16 %v251
    %v263 = vunpack.c.l.b16 %v252
    %v264 = vpack.c.b16 %v257, %v257
    %v265 = vpack.c.b16 %v258, %v258
    %v266 = vpack.c.b16 %v259, %v259
    %v267 = vpack.c.b16 %v260, %v260
    %v268 = vpack.c.b16 %v261, %v261
    %v269 = vpack.c.b16 %v262, %v262
    %v270 = vpack.c.b16 %v263, %v263
    %271 = vrot.lane.b32.xlu0 %v264, 127
    %v272 = vpop.permute.xlu0 %271
    %273 = vrot.lane.b32.xlu0 %v265, 127
    %v274 = vpop.permute.xlu0 %273
    %275 = vrot.lane.b32.xlu0 %v266, 127
    %v276 = vpop.permute.xlu0 %275
    %277 = vrot.lane.b32.xlu0 %v267, 127
    %v278 = vpop.permute.xlu0 %277
    %279 = vrot.lane.b32.xlu0 %v268, 127
    %v280 = vpop.permute.xlu0 %279
    %281 = vrot.lane.b32.xlu0 %v269, 127
    %v282 = vpop.permute.xlu0 %281
    %283 = vrot.lane.b32.xlu0 %v270, 127
    %v284 = vpop.permute.xlu0 %283
    %v285 = vsel %vm84, %v272, %v274
    %v286 = vsel %vm84, %v274, %v276
    %v287 = vsel %vm84, %v276, %v278
    %v288 = vsel %vm84, %v278, %v280
    %v289 = vsel %vm84, %v280, %v282
    %v290 = vsel %vm84, %v282, %v284
    %v293 = vsel %vm175, %v264, %v285
    %v296 = vsel %vm175, %v265, %v286
    %v299 = vsel %vm175, %v266, %v287
    %v302 = vsel %vm175, %v267, %v288
    %v305 = vsel %vm175, %v268, %v289
    %v308 = vsel %vm175, %v269, %v290
    %v311 = vsel %vm175, %v270, %v284
    %v312 = vld [vmem:[#allocation5] sm:$0xf]
    %v313 = vld [vmem:[#allocation5 + $0x4] sm:$0xf]
    %v314 = vld [vmem:[#allocation5] sm:$0xf]
    %v315 = vunpack.c.l.bf16 %v314
    %v318 = vunpack.c.l.b16 %v312
    %v319 = vunpack.c.l.b16 %v313
    %v320 = vpack.c.b16 %v319, %v318
    %vm321 = vcmask 392192
    %v323 = vsel %vm321, %v320, 0
    %325 = vmatpush.bf16.msra.mxu0 0
    %326 = vmatpush.bf16.msra.mxu0 0
    %327 = vmatpush.bf16.msra.mxu0 0
    %328 = vmatpush.bf16.msra.mxu0 0
    %329 = vmatpush.bf16.msra.mxu0 0
    %330 = vmatpush.bf16.msra.mxu0 %v226
    %331 = vmatpush.bf16.msra.mxu0 %v202
    %332 = vmatpush.bf16.msra.mxu0 %v178
    %333 = vmatmul.bf16.gmra.mxu0 %v323
    %v334 = vpop.f32.mrf.mxu0
    %v335 = vadd.f32 0.0, %v334
    %v336 = vpop.f32.mrf.mxu0
    %v337 = vadd.f32 0.0, %v336
    %338 = vdwg.mxu0
    %339 = vmatpush.bf16.msra.mxu0 0
    %340 = vmatpush.bf16.msra.mxu0 0
    %341 = vmatpush.bf16.msra.mxu0 0
    %342 = vmatpush.bf16.msra.mxu0 0
    %343 = vmatpush.bf16.msra.mxu0 0
    %344 = vmatpush.bf16.msra.mxu0 %v230
    %345 = vmatpush.bf16.msra.mxu0 %v206
    %346 = vmatpush.bf16.msra.mxu0 %v182
    %347 = vmatmul.bf16.gmra.mxu0 %v323
    %v348 = vpop.f32.mrf.mxu0
    %v349 = vadd.f32 0.0, %v348
    %v350 = vpop.f32.mrf.mxu0
    %v351 = vadd.f32 0.0, %v350
    %352 = vdwg.mxu0
    %353 = vmatpush.bf16.msra.mxu0 0
    %354 = vmatpush.bf16.msra.mxu0 0
    %355 = vmatpush.bf16.msra.mxu0 0
    %356 = vmatpush.bf16.msra.mxu0 0
    %357 = vmatpush.bf16.msra.mxu0 0
    %358 = vmatpush.bf16.msra.mxu0 %v234
    %359 = vmatpush.bf16.msra.mxu0 %v210
    %360 = vmatpush.bf16.msra.mxu0 %v186
    %361 = vmatmul.bf16.gmra.mxu0 %v323
    %v362 = vpop.f32.mrf.mxu0
    %v363 = vadd.f32 0.0, %v362
    %v364 = vpop.f32.mrf.mxu0
    %v365 = vadd.f32 0.0, %v364
    %366 = vdwg.mxu0
    %367 = vmatpush.bf16.msra.mxu0 0
    %368 = vmatpush.bf16.msra.mxu0 0
    %369 = vmatpush.bf16.msra.mxu0 0
    %370 = vmatpush.bf16.msra.mxu0 0
    %371 = vmatpush.bf16.msra.mxu0 0
    %372 = vmatpush.bf16.msra.mxu0 %v238
    %373 = vmatpush.bf16.msra.mxu0 %v214
    %374 = vmatpush.bf16.msra.mxu0 %v190
    %375 = vmatmul.bf16.gmra.mxu0 %v323
    %v376 = vpop.f32.mrf.mxu0
    %v377 = vadd.f32 0.0, %v376
    %v378 = vpop.f32.mrf.mxu0
    %v379 = vadd.f32 0.0, %v378
    %380 = vdwg.mxu0
    %381 = vmatpush.bf16.msra.mxu0 0
    %382 = vmatpush.bf16.msra.mxu0 0
    %383 = vmatpush.bf16.msra.mxu0 0
    %384 = vmatpush.bf16.msra.mxu0 0
    %385 = vmatpush.bf16.msra.mxu0 0
    %386 = vmatpush.bf16.msra.mxu0 %v242
    %387 = vmatpush.bf16.msra.mxu0 %v218
    %388 = vmatpush.bf16.msra.mxu0 %v194
    %389 = vmatmul.bf16.gmra.mxu0 %v323
    %v390 = vpop.f32.mrf.mxu0
    %v391 = vadd.f32 0.0, %v390
    %v392 = vpop.f32.mrf.mxu0
    %v393 = vadd.f32 0.0, %v392
    %394 = vdwg.mxu0
    %395 = vmatpush.bf16.msra.mxu0 0
    %396 = vmatpush.bf16.msra.mxu0 0
    %397 = vmatpush.bf16.msra.mxu0 0
    %398 = vmatpush.bf16.msra.mxu0 0
    %399 = vmatpush.bf16.msra.mxu0 0
    %400 = vmatpush.bf16.msra.mxu0 %v246
    %401 = vmatpush.bf16.msra.mxu0 %v222
    %402 = vmatpush.bf16.msra.mxu0 %v198
    %403 = vmatmul.bf16.gmra.mxu0 %v323
    %v404 = vpop.f32.mrf.mxu0
    %v405 = vadd.f32 0.0, %v404
    %v406 = vpop.f32.mrf.mxu0
    %v407 = vadd.f32 0.0, %v406
    %408 = vdwg.mxu0
    %v409 = vxor.u32 %v335, 2147483648
    %v410 = vxor.u32 %v349, 2147483648
    %v411 = vxor.u32 %v363, 2147483648
    %v412 = vxor.u32 %v377, 2147483648
    %v413 = vxor.u32 %v391, 2147483648
    %v414 = vxor.u32 %v405, 2147483648
    %v415 = vmul.f32 %v409, 1.442695
    %v416 = vpow.pop %v415
    %v417 = vmul.f32 %v410, 1.442695
    %v418 = vpow.pop %v417
    %v419 = vmul.f32 %v411, 1.442695
    %v420 = vpow.pop %v419
    %v421 = vmul.f32 %v412, 1.442695
    %v422 = vpow.pop %v421
    %v423 = vmul.f32 %v413, 1.442695
    %v424 = vpow.pop %v423
    %v425 = vmul.f32 %v414, 1.442695
    %v426 = vpow.pop %v425
    %v427 = vadd.f32 %v416, 1.0
    %v428 = vadd.f32 %v418, 1.0
    %v429 = vadd.f32 %v420, 1.0
    %v430 = vadd.f32 %v422, 1.0
    %v431 = vadd.f32 %v424, 1.0
    %v432 = vadd.f32 %v426, 1.0
    %v433 = vrcp.pop %v427
    %v434 = vmul.f32 %v427, %v433
    %v435 = vsub.f32 1.0, %v434
    %v436 = vmul.f32 %v433, %v435
    %v437 = vadd.f32 %v433, %v436
    %vm438 = vweird.f32 %v427
    %vm439 = vweird.f32 %v433
    %vm440 = vmor %vm438, %vm439
    %v441 = vsel %vm440, %v433, %v437
    %v442 = vand.u32 2147483647, %v427
    %vm443 = vcmp.eq.f32.partialorder %v442, 8.507059e+37
    %v444 = vand.u32 %v427, 2147483648
    %v445 = vor.u32 1.1754944e-38, %v444
    %v446 = vsel %vm443, %v445, %v441
    %v447 = vmul.f32 1.0, %v446
    %v448 = vrcp.pop %v428
    %v449 = vmul.f32 %v428, %v448
    %v450 = vsub.f32 1.0, %v449
    %v451 = vmul.f32 %v448, %v450
    %v452 = vadd.f32 %v448, %v451
    %vm453 = vweird.f32 %v428
    %vm454 = vweird.f32 %v448
    %vm455 = vmor %vm453, %vm454
    %v456 = vsel %vm455, %v448, %v452
    %v457 = vand.u32 2147483647, %v428
    %vm458 = vcmp.eq.f32.partialorder %v457, 8.507059e+37
    %v459 = vand.u32 %v428, 2147483648
    %v460 = vor.u32 1.1754944e-38, %v459
    %v461 = vsel %vm458, %v460, %v456
    %v462 = vmul.f32 1.0, %v461
    %v463 = vrcp.pop %v429
    %v464 = vmul.f32 %v429, %v463
    %v465 = vsub.f32 1.0, %v464
    %v466 = vmul.f32 %v463, %v465
    %v467 = vadd.f32 %v463, %v466
    %vm468 = vweird.f32 %v429
    %vm469 = vweird.f32 %v463
    %vm470 = vmor %vm468, %vm469
    %v471 = vsel %vm470, %v463, %v467
    %v472 = vand.u32 2147483647, %v429
    %vm473 = vcmp.eq.f32.partialorder %v472, 8.507059e+37
    %v474 = vand.u32 %v429, 2147483648
    %v475 = vor.u32 1.1754944e-38, %v474
    %v476 = vsel %vm473, %v475, %v471
    %v477 = vmul.f32 1.0, %v476
    %v478 = vrcp.pop %v430
    %v479 = vmul.f32 %v430, %v478
    %v480 = vsub.f32 1.0, %v479
    %v481 = vmul.f32 %v478, %v480
    %v482 = vadd.f32 %v478, %v481
    %vm483 = vweird.f32 %v430
    %vm484 = vweird.f32 %v478
    %vm485 = vmor %vm483, %vm484
    %v486 = vsel %vm485, %v478, %v482
    %v487 = vand.u32 2147483647, %v430
    %vm488 = vcmp.eq.f32.partialorder %v487, 8.507059e+37
    %v489 = vand.u32 %v430, 2147483648
    %v490 = vor.u32 1.1754944e-38, %v489
    %v491 = vsel %vm488, %v490, %v486
    %v492 = vmul.f32 1.0, %v491
    %v493 = vrcp.pop %v431
    %v494 = vmul.f32 %v431, %v493
    %v495 = vsub.f32 1.0, %v494
    %v496 = vmul.f32 %v493, %v495
    %v497 = vadd.f32 %v493, %v496
    %vm498 = vweird.f32 %v431
    %vm499 = vweird.f32 %v493
    %vm500 = vmor %vm498, %vm499
    %v501 = vsel %vm500, %v493, %v497
    %v502 = vand.u32 2147483647, %v431
    %vm503 = vcmp.eq.f32.partialorder %v502, 8.507059e+37
    %v504 = vand.u32 %v431, 2147483648
    %v505 = vor.u32 1.1754944e-38, %v504
    %v506 = vsel %vm503, %v505, %v501
    %v507 = vmul.f32 1.0, %v506
    %v508 = vrcp.pop %v432
    %v509 = vmul.f32 %v432, %v508
    %v510 = vsub.f32 1.0, %v509
    %v511 = vmul.f32 %v508, %v510
    %v512 = vadd.f32 %v508, %v511
    %vm513 = vweird.f32 %v432
    %vm514 = vweird.f32 %v508
    %vm515 = vmor %vm513, %vm514
    %v516 = vsel %vm515, %v508, %v512
    %v517 = vand.u32 2147483647, %v432
    %vm518 = vcmp.eq.f32.partialorder %v517, 8.507059e+37
    %v519 = vand.u32 %v432, 2147483648
    %v520 = vor.u32 1.1754944e-38, %v519
    %v521 = vsel %vm518, %v520, %v516
    %v522 = vmul.f32 1.0, %v521
    %v523 = vmax.f32 %v337, 0.0
    %v524 = vmax.f32 %v351, 0.0
    %v525 = vmax.f32 %v365, 0.0
    %v526 = vmax.f32 %v379, 0.0
    %v527 = vmax.f32 %v393, 0.0
    %v528 = vmax.f32 %v407, 0.0
    %v529 = vmul.f32 %v447, %v523
    %v530 = vmul.f32 %v462, %v524
    %v531 = vmul.f32 %v477, %v525
    %v532 = vmul.f32 %v492, %v526
    %v533 = vmul.f32 %v507, %v527
    %v534 = vmul.f32 %v522, %v528
    %v535 = vpack.c.bf16 %v530, %v529
    %v536 = vpack.c.bf16 %v532, %v531
    %v537 = vpack.c.bf16 %v534, %v533
    %538 = vst [vmem:[#allocation7] sm:$0xff] %v535
    %539 = vst [vmem:[#allocation7 + $0x8] sm:$0xff] %v536
    %540 = vst [vmem:[#allocation7 + $0x10] sm:$0xff] %v537
    %v541 = vpack.c.bf16 %v337, %v335
    %v542 = vpack.c.bf16 %v351, %v349
    %v543 = vpack.c.bf16 %v365, %v363
    %v544 = vpack.c.bf16 %v379, %v377
    %v545 = vpack.c.bf16 %v393, %v391
    %v546 = vpack.c.bf16 %v407, %v405
    %547 = vrot.lane.b32.xlu0 %v320, 64
    %v548 = vpop.permute.xlu0 %547
    %vm549 = vcmask 130048
    %v551 = vsel %vm549, %v548, 0
    %553 = vmatpush.bf16.msra.mxu0 0
    %554 = vmatpush.bf16.msra.mxu0 0
    %555 = vmatpush.bf16.msra.mxu0 0
    %556 = vmatpush.bf16.msra.mxu0 0
    %557 = vmatpush.bf16.msra.mxu0 0
    %558 = vmatpush.bf16.msra.mxu0 0
    %559 = vmatpush.bf16.msra.mxu0 0
    %560 = vmatpush.bf16.msra.mxu0 %v541
    %561 = vmatmul.bf16.gmra.mxu0 %v551
    %v562 = vpop.f32.mrf.mxu0
    %v563 = vadd.f32 0.0, %v562
    %v564 = vpop.f32.mrf.mxu0
    %v565 = vadd.f32 0.0, %v564
    %566 = vdwg.mxu0
    %567 = vmatpush.bf16.msra.mxu0 0
    %568 = vmatpush.bf16.msra.mxu0 0
    %569 = vmatpush.bf16.msra.mxu0 0
    %570 = vmatpush.bf16.msra.mxu0 0
    %571 = vmatpush.bf16.msra.mxu0 0
    %572 = vmatpush.bf16.msra.mxu0 0
    %573 = vmatpush.bf16.msra.mxu0 0
    %574 = vmatpush.bf16.msra.mxu0 %v542
    %575 = vmatmul.bf16.gmra.mxu0 %v551
    %v576 = vpop.f32.mrf.mxu0
    %v577 = vadd.f32 0.0, %v576
    %v578 = vpop.f32.mrf.mxu0
    %v579 = vadd.f32 0.0, %v578
    %580 = vdwg.mxu0
    %581 = vmatpush.bf16.msra.mxu0 0
    %582 = vmatpush.bf16.msra.mxu0 0
    %583 = vmatpush.bf16.msra.mxu0 0
    %584 = vmatpush.bf16.msra.mxu0 0
    %585 = vmatpush.bf16.msra.mxu0 0
    %586 = vmatpush.bf16.msra.mxu0 0
    %587 = vmatpush.bf16.msra.mxu0 0
    %588 = vmatpush.bf16.msra.mxu0 %v543
    %589 = vmatmul.bf16.gmra.mxu0 %v551
    %v590 = vpop.f32.mrf.mxu0
    %v591 = vadd.f32 0.0, %v590
    %v592 = vpop.f32.mrf.mxu0
    %v593 = vadd.f32 0.0, %v592
    %594 = vdwg.mxu0
    %595 = vmatpush.bf16.msra.mxu0 0
    %596 = vmatpush.bf16.msra.mxu0 0
    %597 = vmatpush.bf16.msra.mxu0 0
    %598 = vmatpush.bf16.msra.mxu0 0
    %599 = vmatpush.bf16.msra.mxu0 0
    %600 = vmatpush.bf16.msra.mxu0 0
    %601 = vmatpush.bf16.msra.mxu0 0
    %602 = vmatpush.bf16.msra.mxu0 %v544
    %603 = vmatmul.bf16.gmra.mxu0 %v551
    %v604 = vpop.f32.mrf.mxu0
    %v605 = vadd.f32 0.0, %v604
    %v606 = vpop.f32.mrf.mxu0
    %v607 = vadd.f32 0.0, %v606
    %608 = vdwg.mxu0
    %609 = vmatpush.bf16.msra.mxu0 0
    %610 = vmatpush.bf16.msra.mxu0 0
    %611 = vmatpush.bf16.msra.mxu0 0
    %612 = vmatpush.bf16.msra.mxu0 0
    %613 = vmatpush.bf16.msra.mxu0 0
    %614 = vmatpush.bf16.msra.mxu0 0
    %615 = vmatpush.bf16.msra.mxu0 0
    %616 = vmatpush.bf16.msra.mxu0 %v545
    %617 = vmatmul.bf16.gmra.mxu0 %v551
    %v618 = vpop.f32.mrf.mxu0
    %v619 = vadd.f32 0.0, %v618
    %v620 = vpop.f32.mrf.mxu0
    %v621 = vadd.f32 0.0, %v620
    %622 = vdwg.mxu0
    %623 = vmatpush.bf16.msra.mxu0 0
    %624 = vmatpush.bf16.msra.mxu0 0
    %625 = vmatpush.bf16.msra.mxu0 0
    %626 = vmatpush.bf16.msra.mxu0 0
    %627 = vmatpush.bf16.msra.mxu0 0
    %628 = vmatpush.bf16.msra.mxu0 0
    %629 = vmatpush.bf16.msra.mxu0 0
    %630 = vmatpush.bf16.msra.mxu0 %v546
    %631 = vmatmul.bf16.gmra.mxu0 %v551
    %v632 = vpop.f32.mrf.mxu0
    %v633 = vadd.f32 0.0, %v632
    %v634 = vpop.f32.mrf.mxu0
    %v635 = vadd.f32 0.0, %v634
    %636 = vdwg.mxu0
    %637 = vrot.lane.b32.xlu0 %v320, 80
    %v638 = vpop.permute.xlu0 %637
    %646 = vrot.lane.b32.xlu0 %v293, 110
    %v647 = vpop.permute.xlu0 %646
    %648 = vrot.lane.b32.xlu0 %v296, 110
    %v649 = vpop.permute.xlu0 %648
    %650 = vrot.lane.b32.xlu0 %v299, 110
    %v651 = vpop.permute.xlu0 %650
    %652 = vrot.lane.b32.xlu0 %v302, 110
    %v653 = vpop.permute.xlu0 %652
    %654 = vrot.lane.b32.xlu0 %v305, 110
    %v655 = vpop.permute.xlu0 %654
    %656 = vrot.lane.b32.xlu0 %v308, 110
    %v657 = vpop.permute.xlu0 %656
    %658 = vrot.lane.b32.xlu0 %v311, 110
    %v659 = vpop.permute.xlu0 %658
    %v660 = vsel %vm126, %v647, %v649
    %v661 = vsel %vm126, %v649, %v651
    %v662 = vsel %vm126, %v651, %v653
    %v663 = vsel %vm126, %v653, %v655
    %v664 = vsel %vm126, %v655, %v657
    %v665 = vsel %vm126, %v657, %v659
    %v673 = vsel %vm549, %v638, 0
    %675 = vmatpush.bf16.msra.mxu0 0
    %676 = vmatpush.bf16.msra.mxu0 0
    %677 = vmatpush.bf16.msra.mxu0 0
    %678 = vmatpush.bf16.msra.mxu0 0
    %679 = vmatpush.bf16.msra.mxu0 0
    %680 = vmatpush.bf16.msra.mxu0 0
    %681 = vmatpush.bf16.msra.mxu0 0
    %682 = vmatpush.bf16.msra.mxu0 %v660
    %683 = vmatmul.bf16.gmra.mxu0 %v673
    %v684 = vpop.f32.mrf.mxu0
    %v685 = vadd.f32 %v563, %v684
    %v686 = vpop.f32.mrf.mxu0
    %v687 = vadd.f32 %v565, %v686
    %688 = vdwg.mxu0
    %689 = vmatpush.bf16.msra.mxu0 0
    %690 = vmatpush.bf16.msra.mxu0 0
    %691 = vmatpush.bf16.msra.mxu0 0
    %692 = vmatpush.bf16.msra.mxu0 0
    %693 = vmatpush.bf16.msra.mxu0 0
    %694 = vmatpush.bf16.msra.mxu0 0
    %695 = vmatpush.bf16.msra.mxu0 0
    %696 = vmatpush.bf16.msra.mxu0 %v661
    %697 = vmatmul.bf16.gmra.mxu0 %v673
    %v698 = vpop.f32.mrf.mxu0
    %v699 = vadd.f32 %v577, %v698
    %v700 = vpop.f32.mrf.mxu0
    %v701 = vadd.f32 %v579, %v700
    %702 = vdwg.mxu0
    %703 = vmatpush.bf16.msra.mxu0 0
    %704 = vmatpush.bf16.msra.mxu0 0
    %705 = vmatpush.bf16.msra.mxu0 0
    %706 = vmatpush.bf16.msra.mxu0 0
    %707 = vmatpush.bf16.msra.mxu0 0
    %708 = vmatpush.bf16.msra.mxu0 0
    %709 = vmatpush.bf16.msra.mxu0 0
    %710 = vmatpush.bf16.msra.mxu0 %v662
    %711 = vmatmul.bf16.gmra.mxu0 %v673
    %v712 = vpop.f32.mrf.mxu0
    %v713 = vadd.f32 %v591, %v712
    %v714 = vpop.f32.mrf.mxu0
    %v715 = vadd.f32 %v593, %v714
    %716 = vdwg.mxu0
    %717 = vmatpush.bf16.msra.mxu0 0
    %718 = vmatpush.bf16.msra.mxu0 0
    %719 = vmatpush.bf16.msra.mxu0 0
    %720 = vmatpush.bf16.msra.mxu0 0
    %721 = vmatpush.bf16.msra.mxu0 0
    %722 = vmatpush.bf16.msra.mxu0 0
    %723 = vmatpush.bf16.msra.mxu0 0
    %724 = vmatpush.bf16.msra.mxu0 %v663
    %725 = vmatmul.bf16.gmra.mxu0 %v673
    %v726 = vpop.f32.mrf.mxu0
    %v727 = vadd.f32 %v605, %v726
    %v728 = vpop.f32.mrf.mxu0
    %v729 = vadd.f32 %v607, %v728
    %730 = vdwg.mxu0
    %731 = vmatpush.bf16.msra.mxu0 0
    %732 = vmatpush.bf16.msra.mxu0 0
    %733 = vmatpush.bf16.msra.mxu0 0
    %734 = vmatpush.bf16.msra.mxu0 0
    %735 = vmatpush.bf16.msra.mxu0 0
    %736 = vmatpush.bf16.msra.mxu0 0
    %737 = vmatpush.bf16.msra.mxu0 0
    %738 = vmatpush.bf16.msra.mxu0 %v664
    %739 = vmatmul.bf16.gmra.mxu0 %v673
    %v740 = vpop.f32.mrf.mxu0
    %v741 = vadd.f32 %v619, %v740
    %v742 = vpop.f32.mrf.mxu0
    %v743 = vadd.f32 %v621, %v742
    %744 = vdwg.mxu0
    %745 = vmatpush.bf16.msra.mxu0 0
    %746 = vmatpush.bf16.msra.mxu0 0
    %747 = vmatpush.bf16.msra.mxu0 0
    %748 = vmatpush.bf16.msra.mxu0 0
    %749 = vmatpush.bf16.msra.mxu0 0
    %750 = vmatpush.bf16.msra.mxu0 0
    %751 = vmatpush.bf16.msra.mxu0 0
    %752 = vmatpush.bf16.msra.mxu0 %v665
    %753 = vmatmul.bf16.gmra.mxu0 %v673
    %v754 = vpop.f32.mrf.mxu0
    %v755 = vadd.f32 %v633, %v754
    %v756 = vpop.f32.mrf.mxu0
    %v757 = vadd.f32 %v635, %v756
    %758 = vdwg.mxu0
    %v759 = vxor.u32 %v685, 2147483648
    %v760 = vxor.u32 %v699, 2147483648
    %v761 = vxor.u32 %v713, 2147483648
    %v762 = vxor.u32 %v727, 2147483648
    %v763 = vxor.u32 %v741, 2147483648
    %v764 = vxor.u32 %v755, 2147483648
    %v765 = vmul.f32 %v759, 1.442695
    %v766 = vpow.pop %v765
    %v767 = vmul.f32 %v760, 1.442695
    %v768 = vpow.pop %v767
    %v769 = vmul.f32 %v761, 1.442695
    %v770 = vpow.pop %v769
    %v771 = vmul.f32 %v762, 1.442695
    %v772 = vpow.pop %v771
    %v773 = vmul.f32 %v763, 1.442695
    %v774 = vpow.pop %v773
    %v775 = vmul.f32 %v764, 1.442695
    %v776 = vpow.pop %v775
    %v777 = vadd.f32 %v766, 1.0
    %v778 = vadd.f32 %v768, 1.0
    %v779 = vadd.f32 %v770, 1.0
    %v780 = vadd.f32 %v772, 1.0
    %v781 = vadd.f32 %v774, 1.0
    %v782 = vadd.f32 %v776, 1.0
    %v783 = vrcp.pop %v777
    %v784 = vmul.f32 %v777, %v783
    %v785 = vsub.f32 1.0, %v784
    %v786 = vmul.f32 %v783, %v785
    %v787 = vadd.f32 %v783, %v786
    %vm788 = vweird.f32 %v777
    %vm789 = vweird.f32 %v783
    %vm790 = vmor %vm788, %vm789
    %v791 = vsel %vm790, %v783, %v787
    %v792 = vand.u32 2147483647, %v777
    %vm793 = vcmp.eq.f32.partialorder %v792, 8.507059e+37
    %v794 = vand.u32 %v777, 2147483648
    %v795 = vor.u32 1.1754944e-38, %v794
    %v796 = vsel %vm793, %v795, %v791
    %v797 = vmul.f32 1.0, %v796
    %v798 = vrcp.pop %v778
    %v799 = vmul.f32 %v778, %v798
    %v800 = vsub.f32 1.0, %v799
    %v801 = vmul.f32 %v798, %v800
    %v802 = vadd.f32 %v798, %v801
    %vm803 = vweird.f32 %v778
    %vm804 = vweird.f32 %v798
    %vm805 = vmor %vm803, %vm804
    %v806 = vsel %vm805, %v798, %v802
    %v807 = vand.u32 2147483647, %v778
    %vm808 = vcmp.eq.f32.partialorder %v807, 8.507059e+37
    %v809 = vand.u32 %v778, 2147483648
    %v810 = vor.u32 1.1754944e-38, %v809
    %v811 = vsel %vm808, %v810, %v806
    %v812 = vmul.f32 1.0, %v811
    %v813 = vrcp.pop %v779
    %v814 = vmul.f32 %v779, %v813
    %v815 = vsub.f32 1.0, %v814
    %v816 = vmul.f32 %v813, %v815
    %v817 = vadd.f32 %v813, %v816
    %vm818 = vweird.f32 %v779
    %vm819 = vweird.f32 %v813
    %vm820 = vmor %vm818, %vm819
    %v821 = vsel %vm820, %v813, %v817
    %v822 = vand.u32 2147483647, %v779
    %vm823 = vcmp.eq.f32.partialorder %v822, 8.507059e+37
    %v824 = vand.u32 %v779, 2147483648
    %v825 = vor.u32 1.1754944e-38, %v824
    %v826 = vsel %vm823, %v825, %v821
    %v827 = vmul.f32 1.0, %v826
    %v828 = vrcp.pop %v780
    %v829 = vmul.f32 %v780, %v828
    %v830 = vsub.f32 1.0, %v829
    %v831 = vmul.f32 %v828, %v830
    %v832 = vadd.f32 %v828, %v831
    %vm833 = vweird.f32 %v780
    %vm834 = vweird.f32 %v828
    %vm835 = vmor %vm833, %vm834
    %v836 = vsel %vm835, %v828, %v832
    %v837 = vand.u32 2147483647, %v780
    %vm838 = vcmp.eq.f32.partialorder %v837, 8.507059e+37
    %v839 = vand.u32 %v780, 2147483648
    %v840 = vor.u32 1.1754944e-38, %v839
    %v841 = vsel %vm838, %v840, %v836
    %v842 = vmul.f32 1.0, %v841
    %v843 = vrcp.pop %v781
    %v844 = vmul.f32 %v781, %v843
    %v845 = vsub.f32 1.0, %v844
    %v846 = vmul.f32 %v843, %v845
    %v847 = vadd.f32 %v843, %v846
    %vm848 = vweird.f32 %v781
    %vm849 = vweird.f32 %v843
    %vm850 = vmor %vm848, %vm849
    %v851 = vsel %vm850, %v843, %v847
    %v852 = vand.u32 2147483647, %v781
    %vm853 = vcmp.eq.f32.partialorder %v852, 8.507059e+37
    %v854 = vand.u32 %v781, 2147483648
    %v855 = vor.u32 1.1754944e-38, %v854
    %v856 = vsel %vm853, %v855, %v851
    %v857 = vmul.f32 1.0, %v856
    %v858 = vrcp.pop %v782
    %v859 = vmul.f32 %v782, %v858
    %v860 = vsub.f32 1.0, %v859
    %v861 = vmul.f32 %v858, %v860
    %v862 = vadd.f32 %v858, %v861
    %vm863 = vweird.f32 %v782
    %vm864 = vweird.f32 %v858
    %vm865 = vmor %vm863, %vm864
    %v866 = vsel %vm865, %v858, %v862
    %v867 = vand.u32 2147483647, %v782
    %vm868 = vcmp.eq.f32.partialorder %v867, 8.507059e+37
    %v869 = vand.u32 %v782, 2147483648
    %v870 = vor.u32 1.1754944e-38, %v869
    %v871 = vsel %vm868, %v870, %v866
    %v872 = vmul.f32 1.0, %v871
    %v873 = vmax.f32 %v687, 0.0
    %v874 = vmax.f32 %v701, 0.0
    %v875 = vmax.f32 %v715, 0.0
    %v876 = vmax.f32 %v729, 0.0
    %v877 = vmax.f32 %v743, 0.0
    %v878 = vmax.f32 %v757, 0.0
    %v879 = vmul.f32 %v797, %v873
    %v880 = vmul.f32 %v812, %v874
    %v881 = vmul.f32 %v827, %v875
    %v882 = vmul.f32 %v842, %v876
    %v883 = vmul.f32 %v857, %v877
    %v884 = vmul.f32 %v872, %v878
    %v885 = vpack.c.bf16 %v879, %v879
    %v886 = vpack.c.bf16 %v880, %v880
    %v887 = vpack.c.bf16 %v881, %v881
    %v888 = vpack.c.bf16 %v882, %v882
    %v889 = vpack.c.bf16 %v883, %v883
    %v890 = vpack.c.bf16 %v884, %v884
    %892 = vset.pattern.permute.xlu0 88
    %893 = vperm.xlu0 %892, %v315
    %v894 = vpop.permute.xlu0 %893
    %v897 = vunpack.c.l.b16 %v314
    %v898 = vpack.c.b16 %v897, %v897
    %899 = vrot.lane.b32.xlu0 %v898, 48
    %v900 = vpop.permute.xlu0 %899
    %vm901 = vcmask 64512
    %v903 = vsel %vm901, %v900, 0
    %v906 = vsel %vm175, %v885, 0
    %v909 = vsel %vm175, %v886, 0
    %v912 = vsel %vm175, %v887, 0
    %v915 = vsel %vm175, %v888, 0
    %v918 = vsel %vm175, %v889, 0
    %v921 = vsel %vm175, %v890, 0
    %923 = vmatpush.bf16.msra.mxu0 0
    %924 = vmatpush.bf16.msra.mxu0 0
    %925 = vmatpush.bf16.msra.mxu0 0
    %926 = vmatpush.bf16.msra.mxu0 0
    %927 = vmatpush.bf16.msra.mxu0 0
    %928 = vmatpush.bf16.msra.mxu0 0
    %929 = vmatpush.bf16.msra.mxu0 0
    %930 = vmatpush.bf16.msra.mxu0 %v906
    %931 = vmatmul.bf16.gmra.mxu0 %v903
    %v932 = vpop.f32.mrf.mxu0
    %v933 = vadd.f32 %v894, %v932
    %v934 = vpop.f32.mrf.mxu0
    %935 = vdwg.mxu0
    %936 = vmatpush.bf16.msra.mxu0 0
    %937 = vmatpush.bf16.msra.mxu0 0
    %938 = vmatpush.bf16.msra.mxu0 0
    %939 = vmatpush.bf16.msra.mxu0 0
    %940 = vmatpush.bf16.msra.mxu0 0
    %941 = vmatpush.bf16.msra.mxu0 0
    %942 = vmatpush.bf16.msra.mxu0 0
    %943 = vmatpush.bf16.msra.mxu0 %v909
    %944 = vmatmul.bf16.gmra.mxu0 %v903
    %v945 = vpop.f32.mrf.mxu0
    %v946 = vadd.f32 %v894, %v945
    %v947 = vpop.f32.mrf.mxu0
    %948 = vdwg.mxu0
    %949 = vmatpush.bf16.msra.mxu0 0
    %950 = vmatpush.bf16.msra.mxu0 0
    %951 = vmatpush.bf16.msra.mxu0 0
    %952 = vmatpush.bf16.msra.mxu0 0
    %953 = vmatpush.bf16.msra.mxu0 0
    %954 = vmatpush.bf16.msra.mxu0 0
    %955 = vmatpush.bf16.msra.mxu0 0
    %956 = vmatpush.bf16.msra.mxu0 %v912
    %957 = vmatmul.bf16.gmra.mxu0 %v903
    %v958 = vpop.f32.mrf.mxu0
    %v959 = vadd.f32 %v894, %v958
    %v960 = vpop.f32.mrf.mxu0
    %961 = vdwg.mxu0
    %962 = vmatpush.bf16.msra.mxu0 0
    %963 = vmatpush.bf16.msra.mxu0 0
    %964 = vmatpush.bf16.msra.mxu0 0
    %965 = vmatpush.bf16.msra.mxu0 0
    %966 = vmatpush.bf16.msra.mxu0 0
    %967 = vmatpush.bf16.msra.mxu0 0
    %968 = vmatpush.bf16.msra.mxu0 0
    %969 = vmatpush.bf16.msra.mxu0 %v915
    %970 = vmatmul.bf16.gmra.mxu0 %v903
    %v971 = vpop.f32.mrf.mxu0
    %v972 = vadd.f32 %v894, %v971
    %v973 = vpop.f32.mrf.mxu0
    %974 = vdwg.mxu0
    %975 = vmatpush.bf16.msra.mxu0 0
    %976 = vmatpush.bf16.msra.mxu0 0
    %977 = vmatpush.bf16.msra.mxu0 0
    %978 = vmatpush.bf16.msra.mxu0 0
    %979 = vmatpush.bf16.msra.mxu0 0
    %980 = vmatpush.bf16.msra.mxu0 0
    %981 = vmatpush.bf16.msra.mxu0 0
    %982 = vmatpush.bf16.msra.mxu0 %v918
    %983 = vmatmul.bf16.gmra.mxu0 %v903
    %v984 = vpop.f32.mrf.mxu0
    %v985 = vadd.f32 %v894, %v984
    %v986 = vpop.f32.mrf.mxu0
    %987 = vdwg.mxu0
    %988 = vmatpush.bf16.msra.mxu0 0
    %989 = vmatpush.bf16.msra.mxu0 0
    %990 = vmatpush.bf16.msra.mxu0 0
    %991 = vmatpush.bf16.msra.mxu0 0
    %992 = vmatpush.bf16.msra.mxu0 0
    %993 = vmatpush.bf16.msra.mxu0 0
    %994 = vmatpush.bf16.msra.mxu0 0
    %995 = vmatpush.bf16.msra.mxu0 %v921
    %996 = vmatmul.bf16.gmra.mxu0 %v903
    %v997 = vpop.f32.mrf.mxu0
    %v998 = vadd.f32 %v894, %v997
    %v999 = vpop.f32.mrf.mxu0
    %1000 = vdwg.mxu0
    %v1001 = vld [vmem:[%s248] sm:$0xff]
    %v1002 = vld [vmem:[%s248 + $0x8] sm:$0xff]
    %v1003 = vld [vmem:[%s248 + $0x10] sm:$0xff]
    %v1004 = vld [vmem:[%s248 + $0x18] sm:$0xf]
    %v1005 = vunpack.c.l.bf16 %v1001
    %v1006 = vunpack.c.h.bf16 %v1001
    %v1007 = vunpack.c.l.bf16 %v1002
    %v1008 = vunpack.c.h.bf16 %v1002
    %v1009 = vunpack.c.l.bf16 %v1003
    %v1010 = vunpack.c.h.bf16 %v1003
    %v1011 = vunpack.c.l.bf16 %v1004
    %1019 = vrot.lane.b32.xlu0 %v1005, 109
    %v1020 = vpop.permute.xlu0 %1019
    %1021 = vrot.lane.b32.xlu0 %v1006, 109
    %v1022 = vpop.permute.xlu0 %1021
    %1023 = vrot.lane.b32.xlu0 %v1007, 109
    %v1024 = vpop.permute.xlu0 %1023
    %1025 = vrot.lane.b32.xlu0 %v1008, 109
    %v1026 = vpop.permute.xlu0 %1025
    %1027 = vrot.lane.b32.xlu0 %v1009, 109
    %v1028 = vpop.permute.xlu0 %1027
    %1029 = vrot.lane.b32.xlu0 %v1010, 109
    %v1030 = vpop.permute.xlu0 %1029
    %1031 = vrot.lane.b32.xlu0 %v1011, 109
    %v1032 = vpop.permute.xlu0 %1031
    %vm1033 = vcmask 891904
    %v1034 = vsel %vm1033, %v1020, %v1022
    %v1035 = vsel %vm1033, %v1022, %v1024
    %v1036 = vsel %vm1033, %v1024, %v1026
    %v1037 = vsel %vm1033, %v1026, %v1028
    %v1038 = vsel %vm1033, %v1028, %v1030
    %v1039 = vsel %vm1033, %v1030, %v1032
    %v1046 = vadd.f32 %v933, %v1034
    %v1047 = vadd.f32 %v946, %v1035
    %v1048 = vadd.f32 %v959, %v1036
    %v1049 = vadd.f32 %v972, %v1037
    %v1050 = vadd.f32 %v985, %v1038
    %v1051 = vadd.f32 %v998, %v1039
    %v1052 = vpack.c.bf16 %v1047, %v1046
    %v1053 = vpack.c.bf16 %v1049, %v1048
    %v1054 = vpack.c.bf16 %v1051, %v1050
    %1055 = vst [vmem:[#allocation8] sm:$0xff] %v1052
    %1056 = vst [vmem:[#allocation8 + $0x8] sm:$0xff] %v1053
    %1057 = vst [vmem:[#allocation8 + $0x10] sm:$0xff] %v1054
    // Predicated region
    $region18: #{tpu_custom_call.1} parent=1 // pred_check
      _
    $region19: #{tpu_custom_call.1} parent=1 // pred_check_branch
      %1059 = sbr.rel (0) target = $region21
    $region20: #{tpu_custom_call.1} parent=1 // pred_region
      %1061 = vsyncadd [#allocation4], 0
      %s1063 = sshll.u32 [#allocation7], 4
      %s1064 = int_to_ptr.vmem [resolvable:$true] %s1063
      %s1065 = sshll.u32 %s2, 4
      %s1066 = int_to_ptr.hbm [resolvable:$true] %s1065
      %1068 = dma.vmem_to_hbm [thread:$0]  %s1064, 384, %s1066, [#allocation4]
    $region21: #{tpu_custom_call.1} parent=1 // pred_fallthru
      _
    // Predicated region
    $region22: #{tpu_custom_call.1} parent=1 // pred_check
      _
    $region23: #{tpu_custom_call.1} parent=1 // pred_check_branch
      %1070 = sbr.rel (0) target = $region25
    $region24: #{tpu_custom_call.1} parent=1 // pred_region
      %1072 = vsyncadd [#allocation9], 0
      %s1074 = sshll.u32 [#allocation8], 4
      %s1075 = int_to_ptr.vmem [resolvable:$true] %s1074
      %s1076 = sshll.u32 %s3, 4
      %s1077 = int_to_ptr.hbm [resolvable:$true] %s1076
      %1079 = dma.vmem_to_hbm [thread:$0]  %s1075, 384, %s1077, [#allocation9]
    $region25: #{tpu_custom_call.1} parent=1 // pred_fallthru
      _
    // Predicated region
    $region26: #{tpu_custom_call.1} parent=1 // pred_check
      _
    $region27: #{tpu_custom_call.1} parent=1 // pred_check_branch
      %1081 = sbr.rel (0) target = $region29
    $region28: #{tpu_custom_call.1} parent=1 // pred_region
      %1083 = dma.done [#allocation4], 384
    $region29: #{tpu_custom_call.1} parent=1 // pred_fallthru
      _
    // Predicated region
    $region30: #{tpu_custom_call.1} parent=1 // pred_check
      _
    $region31: #{tpu_custom_call.1} parent=1 // pred_check_branch
      %1085 = sbr.rel (0) target = $region33
    $region32: #{tpu_custom_call.1} parent=1 // pred_region
      %1087 = dma.done [#allocation9], 384
    $region33: #{tpu_custom_call.1} parent=1 // pred_fallthru
      _
    %1088 = vsyncpa [#allocation3], 1
    %1089 = vsyncpa [#allocation6], 1
    %1090 = vsyncpa [#allocation4], 1
    %1091 = vsyncpa [#allocation9], 1

</llo_original>
